<compile_context>
chip_gen: v7x
topology: tpu7x:2x2x1
jax: 0.10.0
libtpu: 0.0.40
codegen_flags: <defaults>
</compile_context>

<pallas_src>
import jax
import jax.numpy as jnp
from jax.experimental import pallas as pl
from jax.experimental.pallas import tpu as pltpu

BN_EPS = 1e-5


def attention_kernel(xin_ref, xhid_ref, w_ref, b_ref, qw_ref,
                     qb_ref, prelu_ref, bn_ref,
                     fuse_ref, atten_ref):
    TB = fuse_ref.shape[0]  # rows [0:TB] = exec channel, [TB:2*TB] = file channel

    # One fused projection for both channels: [2*TB, F_out]
    h = jnp.dot(xin_ref[...], w_ref[...],
                preferred_element_type=jnp.float32) + b_ref[...]

    # PReLU (single shared slope), applied once to the stacked block
    a = prelu_ref[0, 0]
    h = jnp.where(h >= 0.0, h, a * h)

    # q: Linear(out_f, 1) as VPU multiply + lane reduce (XLU), avoids width-1 MXU matmul
    s = jnp.sum(h * qw_ref[...], axis=-1, keepdims=True) + qb_ref[0, 0]  # [2*TB, 1]

    s_e = s[:TB, :]
    s_f = s[TB:, :]

    # BatchNorm1d(2), eval mode, per channel (channel 0 = exec, 1 = file)
    g0, g1 = bn_ref[0, 0], bn_ref[0, 1]
    b0, b1 = bn_ref[1, 0], bn_ref[1, 1]
    m0, m1 = bn_ref[2, 0], bn_ref[2, 1]
    v0, v1 = bn_ref[3, 0], bn_ref[3, 1]
    n_e = (s_e - m0) * jax.lax.rsqrt(v0 + BN_EPS) * g0 + b0
    n_f = (s_f - m1) * jax.lax.rsqrt(v1 + BN_EPS) * g1 + b1

    # tanh then 2-element softmax == sigmoid of the difference
    t_e = jnp.tanh(n_e)
    t_f = jnp.tanh(n_f)
    a_e = jax.nn.sigmoid(t_e - t_f)    # [TB, 1]
    a_f = 1.0 - a_e                    # [TB, 1]

    # fuse_embed = atten_cof @ hid_inputs == a_e * exec_hid + a_f * file_hid
    hid = xhid_ref[...]                # [2*TB, H]
    fuse_ref[...] = a_e * hid[:TB, :] + a_f * hid[TB:, :]

    # single merged store for the attention coefficients, [TB, 2]
    atten_ref[...] = jnp.concatenate([a_e, a_f], axis=-1)


def attention_layer(exec_input, file_input, exec_hid, file_hid, params, tb=None):
    B, F_in = exec_input.shape
    H = exec_hid.shape[1]
    F_out = params["w"].shape[1]

    if tb is None:
        tb = B                      # batch is small; one tile (grid of 1)
    assert B % tb == 0, "batch must be divisible by the batch tile (no ragged tail handling)"
    G = B // tb

    # Stack the two channels along the sublane (batch) axis, tile-interleaved so
    # each grid step sees a single contiguous [2*tb, ...] block:
    #   rows [0:tb] = exec tile i, rows [tb:2*tb] = file tile i
    xin = jnp.concatenate(
        [exec_input.reshape(G, tb, F_in), file_input.reshape(G, tb, F_in)],
        axis=1).reshape(2 * B, F_in)
    xhid = jnp.concatenate(
        [exec_hid.reshape(G, tb, H), file_hid.reshape(G, tb, H)],
        axis=1).reshape(2 * B, H)

    qw_row = params["qw"].reshape(1, F_out)   # row layout for VPU mul + lane reduce

    fuse, atten = pl.pallas_call(
        attention_kernel,
        grid_spec=pltpu.PrefetchScalarGridSpec(
            num_scalar_prefetch=0,
            grid=(G,),
            in_specs=[
                pl.BlockSpec((2 * tb, F_in), lambda i: (i, 0)),   # stacked inputs
                pl.BlockSpec((2 * tb, H), lambda i: (i, 0)),      # stacked hidden
                pl.BlockSpec((F_in, F_out), lambda i: (0, 0)),    # linear weight^T
                pl.BlockSpec((1, F_out), lambda i: (0, 0)),       # linear bias
                pl.BlockSpec((1, F_out), lambda i: (0, 0)),       # q weight as row
                pl.BlockSpec(memory_space=pltpu.MemorySpace.SMEM),  # q bias (1,1)
                pl.BlockSpec(memory_space=pltpu.MemorySpace.SMEM),  # PReLU a (1,1)
                pl.BlockSpec(memory_space=pltpu.MemorySpace.SMEM),  # BN params (4,2)
            ],
            out_specs=[
                pl.BlockSpec((tb, H), lambda i: (i, 0)),
                pl.BlockSpec((tb, 2), lambda i: (i, 0)),
            ],
        ),
        out_shape=(
            jax.ShapeDtypeStruct((B, H), jnp.float32),
            jax.ShapeDtypeStruct((B, 2), jnp.float32),
        ),
        compiler_params=pltpu.CompilerParams(dimension_semantics=("parallel",)),
    )(xin, xhid, params["w"], params["b"], qw_row,
      params["qb"], params["prelu_a"], params["bn"])

    atten_cof = atten.reshape(B, 1, 2)   # matches PyTorch atten_cof [B, 1, 2]
    return fuse, atten_cof


def reference_jax(exec_input, file_input, exec_hid, file_hid, p):
    """Pure-JAX reference mirroring the PyTorch forward (inference mode)."""
    inputs = jnp.stack([exec_input, file_input], axis=1)            # [B,2,F_in]
    hidden = inputs @ p["w"] + p["b"][0]                            # [B,2,F_out]
    a = p["prelu_a"][0, 0]
    hidden = jnp.where(hidden >= 0, hidden, a * hidden)
    atten = hidden @ p["qw"] + p["qb"][0, 0]                        # [B,2,1]
    g, bb, m, v = p["bn"][0], p["bn"][1], p["bn"][2], p["bn"][3]
    atten = (atten - m[None, :, None]) / jnp.sqrt(v[None, :, None] + BN_EPS) \
            * g[None, :, None] + bb[None, :, None]
    atten = jnp.tanh(atten)
    atten = jax.nn.softmax(atten, axis=1)                           # [B,2,1]
    atten_cof = atten.reshape(atten.shape[0], 1, 2)                 # [B,1,2]
    hid_inputs = jnp.stack([exec_hid, file_hid], axis=1)            # [B,2,H]
    fuse = jnp.squeeze(atten_cof @ hid_inputs, axis=1)              # [B,H]
    return fuse, atten_cof


if __name__ == "__main__":
    key = jax.random.PRNGKey(0)
    B, F_in, F_out, H = 8, 16, 32, 32

    ks = jax.random.split(key, 8)
    exec_input = jax.random.normal(ks[0], (B, F_in), jnp.float32)
    file_input = jax.random.normal(ks[1], (B, F_in), jnp.float32)
    exec_hid = jax.random.normal(ks[2], (B, H), jnp.float32)
    file_hid = jax.random.normal(ks[3], (B, H), jnp.float32)

    # Deterministic parameter init (shapes from the module's __init__).
    params = {
        "w": jax.random.normal(ks[4], (F_in, F_out), jnp.float32) * 0.1,   # Linear weight^T
        "b": jax.random.normal(ks[5], (1, F_out), jnp.float32) * 0.1,      # Linear bias
        "qw": jax.random.normal(ks[6], (F_out, 1), jnp.float32) * 0.1,     # q weight^T
        "qb": jax.random.normal(ks[7], (1, 1), jnp.float32) * 0.1,         # q bias
        "prelu_a": jnp.full((1, 1), 0.25, jnp.float32),                    # PReLU default
        # BatchNorm1d(2): gamma=1, beta=0, running_mean=0, running_var=1
        "bn": jnp.stack([jnp.ones(2), jnp.zeros(2),
                         jnp.zeros(2), jnp.ones(2)]).astype(jnp.float32),  # (4,2)
    }

    fuse, atten_cof = attention_layer(exec_input, file_input, exec_hid, file_hid, params)
    fuse = jax.block_until_ready(fuse)
    atten_cof = jax.block_until_ready(atten_cof)

    fuse_ref, atten_ref = reference_jax(exec_input, file_input, exec_hid, file_hid, params)
    assert jnp.allclose(fuse, fuse_ref, atol=1e-5, rtol=1e-5), "fuse_embed mismatch"
    assert jnp.allclose(atten_cof, atten_ref, atol=1e-5, rtol=1e-5), "atten_cof mismatch"
    assert fuse.shape == (B, H) and atten_cof.shape == (B, 1, 2)

    print("KERNEL_OK")
</pallas_src>

<mosaic_0001>
module attributes {stable_mosaic.version = 11 : i64} {
  func.func @attention_kernel(%arg0: i32, %arg1: memref<16x16xf32, #tpu.memory_space<vmem>>, %arg2: memref<16x32xf32, #tpu.memory_space<vmem>>, %arg3: memref<16x32xf32, #tpu.memory_space<vmem>>, %arg4: memref<1x32xf32, #tpu.memory_space<vmem>>, %arg5: memref<1x32xf32, #tpu.memory_space<vmem>>, %arg6: memref<1x1xf32, #tpu.memory_space<smem>>, %arg7: memref<1x1xf32, #tpu.memory_space<smem>>, %arg8: memref<4x2xf32, #tpu.memory_space<smem>>, %arg9: memref<8x32xf32, #tpu.memory_space<vmem>>, %arg10: memref<8x2xf32, #tpu.memory_space<vmem>>) attributes {dimension_semantics = [#tpu.dimension_semantics<parallel>], iteration_bounds = array<i64: 1>, scalar_prefetch = 0 : i64, scratch_operands = 0 : i64, tpu.core_type = #tpu.core_type<tc>, window_params = [{transform_indices = @transform_0, window_bounds = array<i64: 16, 16>}, {transform_indices = @transform_1, window_bounds = array<i64: 16, 32>}, {pipeline_mode = #tpu.pipeline_mode<synchronous>, transform_indices = @transform_2, window_bounds = array<i64: 16, 32>}, {pipeline_mode = #tpu.pipeline_mode<synchronous>, transform_indices = @transform_3, window_bounds = array<i64: 1, 32>}, {pipeline_mode = #tpu.pipeline_mode<synchronous>, transform_indices = @transform_4, window_bounds = array<i64: 1, 32>}, {transform_indices = @transform_5, window_bounds = array<i64: 1, 1>}, {transform_indices = @transform_6, window_bounds = array<i64: 1, 1>}, {transform_indices = @transform_7, window_bounds = array<i64: 4, 2>}, {transform_indices = @transform_8, window_bounds = array<i64: 8, 32>}, {transform_indices = @transform_9, window_bounds = array<i64: 8, 2>}]} {
    %c0 = arith.constant 0 : index
    %c0_0 = arith.constant 0 : index
    %0 = vector.load %arg1[%c0, %c0_0] : memref<16x16xf32, #tpu.memory_space<vmem>>, vector<16x16xf32>
    %c0_1 = arith.constant 0 : index
    %c0_2 = arith.constant 0 : index
    %1 = vector.load %arg3[%c0_1, %c0_2] : memref<16x32xf32, #tpu.memory_space<vmem>>, vector<16x32xf32>
    %cst = arith.constant dense<0.000000e+00> : vector<16x32xf32>
    %2 = tpu.matmul %0, %1, %cst {dimension_numbers = #tpu.dot_dimension_numbers<[1], [0], [0], [1], [0, 0, 1, 1], [], []>} : vector<16x16xf32>, vector<16x32xf32>, vector<16x32xf32> -> vector<16x32xf32>
    %c0_3 = arith.constant 0 : index
    %c0_4 = arith.constant 0 : index
    %3 = vector.load %arg4[%c0_3, %c0_4] : memref<1x32xf32, #tpu.memory_space<vmem>>, vector<1x32xf32>
    %4 = vector.broadcast %3 : vector<1x32xf32> to vector<16x32xf32>
    %5 = arith.addf %2, %4 : vector<16x32xf32>
    %c0_5 = arith.constant 0 : index
    %c0_6 = arith.constant 0 : index
    %6 = memref.load %arg7[%c0_5, %c0_6] : memref<1x1xf32, #tpu.memory_space<smem>>
    %cst_7 = arith.constant 0.000000e+00 : f32
    %7 = vector.broadcast %cst_7 : f32 to vector<16x32xf32>
    %8 = arith.cmpf oge, %5, %7 : vector<16x32xf32>
    %9 = vector.broadcast %6 : f32 to vector<16x32xf32>
    %10 = arith.mulf %9, %5 : vector<16x32xf32>
    %11 = arith.select %8, %5, %10 : vector<16x32xi1>, vector<16x32xf32>
    %c0_8 = arith.constant 0 : index
    %c0_9 = arith.constant 0 : index
    %12 = vector.load %arg5[%c0_8, %c0_9] : memref<1x32xf32, #tpu.memory_space<vmem>>, vector<1x32xf32>
    %13 = vector.broadcast %12 : vector<1x32xf32> to vector<16x32xf32>
    %14 = arith.mulf %11, %13 : vector<16x32xf32>
    %cst_10 = arith.constant dense<0.000000e+00> : vector<16xf32>
    %15 = vector.multi_reduction <add>, %14, %cst_10 [1] : vector<16x32xf32> to vector<16xf32>
    %16 = vector.shape_cast %15 : vector<16xf32> to vector<16x1xf32>
    %c0_11 = arith.constant 0 : index
    %c0_12 = arith.constant 0 : index
    %17 = memref.load %arg6[%c0_11, %c0_12] : memref<1x1xf32, #tpu.memory_space<smem>>
    %18 = vector.broadcast %17 : f32 to vector<16x1xf32>
    %19 = arith.addf %16, %18 : vector<16x1xf32>
    %20 = vector.extract_strided_slice %19 {offsets = [0, 0], sizes = [8, 1], strides = [1, 1]} : vector<16x1xf32> to vector<8x1xf32>
    %21 = vector.extract_strided_slice %19 {offsets = [8, 0], sizes = [8, 1], strides = [1, 1]} : vector<16x1xf32> to vector<8x1xf32>
    %c0_13 = arith.constant 0 : index
    %c0_14 = arith.constant 0 : index
    %22 = memref.load %arg8[%c0_13, %c0_14] : memref<4x2xf32, #tpu.memory_space<smem>>
    %c0_15 = arith.constant 0 : index
    %c1 = arith.constant 1 : index
    %23 = memref.load %arg8[%c0_15, %c1] : memref<4x2xf32, #tpu.memory_space<smem>>
    %c1_16 = arith.constant 1 : index
    %c0_17 = arith.constant 0 : index
    %24 = memref.load %arg8[%c1_16, %c0_17] : memref<4x2xf32, #tpu.memory_space<smem>>
    %c1_18 = arith.constant 1 : index
    %c1_19 = arith.constant 1 : index
    %25 = memref.load %arg8[%c1_18, %c1_19] : memref<4x2xf32, #tpu.memory_space<smem>>
    %c2 = arith.constant 2 : index
    %c0_20 = arith.constant 0 : index
    %26 = memref.load %arg8[%c2, %c0_20] : memref<4x2xf32, #tpu.memory_space<smem>>
    %c2_21 = arith.constant 2 : index
    %c1_22 = arith.constant 1 : index
    %27 = memref.load %arg8[%c2_21, %c1_22] : memref<4x2xf32, #tpu.memory_space<smem>>
    %c3 = arith.constant 3 : index
    %c0_23 = arith.constant 0 : index
    %28 = memref.load %arg8[%c3, %c0_23] : memref<4x2xf32, #tpu.memory_space<smem>>
    %c3_24 = arith.constant 3 : index
    %c1_25 = arith.constant 1 : index
    %29 = memref.load %arg8[%c3_24, %c1_25] : memref<4x2xf32, #tpu.memory_space<smem>>
    %30 = vector.broadcast %26 : f32 to vector<8x1xf32>
    %31 = arith.subf %20, %30 : vector<8x1xf32>
    %cst_26 = arith.constant 9.99999974E-6 : f32
    %32 = arith.addf %28, %cst_26 : f32
    %33 = math.rsqrt %32 : f32
    %34 = vector.broadcast %33 : f32 to vector<8x1xf32>
    %35 = arith.mulf %31, %34 : vector<8x1xf32>
    %36 = vector.broadcast %22 : f32 to vector<8x1xf32>
    %37 = arith.mulf %35, %36 : vector<8x1xf32>
    %38 = vector.broadcast %24 : f32 to vector<8x1xf32>
    %39 = arith.addf %37, %38 : vector<8x1xf32>
    %40 = vector.broadcast %27 : f32 to vector<8x1xf32>
    %41 = arith.subf %21, %40 : vector<8x1xf32>
    %cst_27 = arith.constant 9.99999974E-6 : f32
    %42 = arith.addf %29, %cst_27 : f32
    %43 = math.rsqrt %42 : f32
    %44 = vector.broadcast %43 : f32 to vector<8x1xf32>
    %45 = arith.mulf %41, %44 : vector<8x1xf32>
    %46 = vector.broadcast %23 : f32 to vector<8x1xf32>
    %47 = arith.mulf %45, %46 : vector<8x1xf32>
    %48 = vector.broadcast %25 : f32 to vector<8x1xf32>
    %49 = arith.addf %47, %48 : vector<8x1xf32>
    %50 = math.tanh %39 : vector<8x1xf32>
    %51 = math.tanh %49 : vector<8x1xf32>
    %52 = arith.subf %50, %51 : vector<8x1xf32>
    %53 = arith.negf %52 : vector<8x1xf32>
    %54 = math.exp %53 : vector<8x1xf32>
    %cst_28 = arith.constant 1.000000e+00 : f32
    %55 = vector.broadcast %cst_28 : f32 to vector<8x1xf32>
    %56 = arith.addf %55, %54 : vector<8x1xf32>
    %57 = arith.divf %55, %56 : vector<8x1xf32>
    %cst_29 = arith.constant 1.000000e+00 : f32
    %58 = vector.broadcast %cst_29 : f32 to vector<8x1xf32>
    %59 = arith.subf %58, %57 : vector<8x1xf32>
    %c0_30 = arith.constant 0 : index
    %c0_31 = arith.constant 0 : index
    %60 = vector.load %arg2[%c0_30, %c0_31] : memref<16x32xf32, #tpu.memory_space<vmem>>, vector<16x32xf32>
    %61 = vector.extract_strided_slice %60 {offsets = [0, 0], sizes = [8, 32], strides = [1, 1]} : vector<16x32xf32> to vector<8x32xf32>
    %62 = vector.broadcast %57 : vector<8x1xf32> to vector<8x32xf32>
    %63 = arith.mulf %62, %61 : vector<8x32xf32>
    %64 = vector.extract_strided_slice %60 {offsets = [8, 0], sizes = [8, 32], strides = [1, 1]} : vector<16x32xf32> to vector<8x32xf32>
    %65 = vector.broadcast %59 : vector<8x1xf32> to vector<8x32xf32>
    %66 = arith.mulf %65, %64 : vector<8x32xf32>
    %67 = arith.addf %63, %66 : vector<8x32xf32>
    %c0_32 = arith.constant 0 : index
    %c0_33 = arith.constant 0 : index
    %68 = vector.load %arg9[%c0_32, %c0_33] : memref<8x32xf32, #tpu.memory_space<vmem>>, vector<8x32xf32>
    tpu.vector_store %arg9[%c0_32, %c0_33], %67 {strides = array<i32>} : memref<8x32xf32, #tpu.memory_space<vmem>>, vector<8x32xf32>,
    %69 = tpu.concatenate %57, %59 in 1 : vector<8x1xf32>, vector<8x1xf32> -> vector<8x2xf32>
    %c0_34 = arith.constant 0 : index
    %c0_35 = arith.constant 0 : index
    %70 = vector.load %arg10[%c0_34, %c0_35] : memref<8x2xf32, #tpu.memory_space<vmem>>, vector<8x2xf32>
    tpu.vector_store %arg10[%c0_34, %c0_35], %69 {strides = array<i32>} : memref<8x2xf32, #tpu.memory_space<vmem>>, vector<8x2xf32>,
    return
  }
  func.func @transform_0(%arg0: i32) -> (i32, i32) {
    %c0_i32 = arith.constant 0 : i32
    %c0_i32_0 = arith.constant 0 : i32
    return %arg0, %c0_i32 : i32, i32
  }
  func.func @transform_1(%arg0: i32) -> (i32, i32) {
    %c0_i32 = arith.constant 0 : i32
    %c0_i32_0 = arith.constant 0 : i32
    return %arg0, %c0_i32 : i32, i32
  }
  func.func @transform_2(%arg0: i32) -> (i32, i32) {
    %c0_i32 = arith.constant 0 : i32
    %c0_i32_0 = arith.constant 0 : i32
    %c0_i32_1 = arith.constant 0 : i32
    return %c0_i32, %c0_i32_0 : i32, i32
  }
  func.func @transform_3(%arg0: i32) -> (i32, i32) {
    %c0_i32 = arith.constant 0 : i32
    %c0_i32_0 = arith.constant 0 : i32
    %c0_i32_1 = arith.constant 0 : i32
    return %c0_i32, %c0_i32_0 : i32, i32
  }
  func.func @transform_4(%arg0: i32) -> (i32, i32) {
    %c0_i32 = arith.constant 0 : i32
    %c0_i32_0 = arith.constant 0 : i32
    %c0_i32_1 = arith.constant 0 : i32
    return %c0_i32, %c0_i32_0 : i32, i32
  }
  func.func @transform_5(%arg0: i32) -> (i32, i32) {
    %c0_i32 = arith.constant 0 : i32
    %c0_i32_0 = arith.constant 0 : i32
    %c0_i32_1 = arith.constant 0 : i32
    return %c0_i32, %c0_i32_0 : i32, i32
  }
  func.func @transform_6(%arg0: i32) -> (i32, i32) {
    %c0_i32 = arith.constant 0 : i32
    %c0_i32_0 = arith.constant 0 : i32
    %c0_i32_1 = arith.constant 0 : i32
    return %c0_i32, %c0_i32_0 : i32, i32
  }
  func.func @transform_7(%arg0: i32) -> (i32, i32) {
    %c0_i32 = arith.constant 0 : i32
    %c0_i32_0 = arith.constant 0 : i32
    %c0_i32_1 = arith.constant 0 : i32
    return %c0_i32, %c0_i32_0 : i32, i32
  }
  func.func @transform_8(%arg0: i32) -> (i32, i32) {
    %c0_i32 = arith.constant 0 : i32
    %c0_i32_0 = arith.constant 0 : i32
    return %arg0, %c0_i32 : i32, i32
  }
  func.func @transform_9(%arg0: i32) -> (i32, i32) {
    %c0_i32 = arith.constant 0 : i32
    %c0_i32_0 = arith.constant 0 : i32
    return %arg0, %c0_i32 : i32, i32
  }
}

</mosaic_0001>

<llo_original>
// kernel: tpu_custom_call.1
$region0: #{tpu_custom_call.1}
  #allocation0 [shape = 'u32[]', space=smem, size = 0x4, offset = 0x4, fixed_abs, tag = 'smem constant byte address 0x4 - core index']
  #allocation1 [shape = 'u32[144,128]{1,0:T(1,128)}', space=vmem, size = 0x12000, scoped, tag = 'internal scratch']
  #allocation2 [shape = 'f32[1,1]{1,0:T(1,128)S(6)}', space=smem, size = 0x200, scoped, tag = 'scoped memory for tpu_custom_call.1']
  #allocation3 [shape = 'f32[1,1]{1,0:T(1,128)S(6)}', space=smem, size = 0x200, scoped, tag = 'scoped memory for tpu_custom_call.1']
  %s0 = inlined_call_operand.hbm [shape: f32[16,16], index: 0, kind: input, shape index: {}]
  %s1 = inlined_call_operand.vmem [shape: f32[16,32], index: 1, kind: input, shape index: {}]
  %s2 = inlined_call_operand.hbm [shape: f32[16,32], index: 2, kind: input, shape index: {}]
  %s3 = inlined_call_operand.vmem [shape: f32[1,32], index: 3, kind: input, shape index: {}]
  %s4 = inlined_call_operand.vmem [shape: f32[1,32], index: 4, kind: input, shape index: {}]
  %s5 = inlined_call_operand.<no memory space> [shape: f32[1,1], index: 5, kind: input, shape index: {}]
  %s6 = inlined_call_operand.<no memory space> [shape: f32[1,1], index: 6, kind: input, shape index: {}]
  %s7 = inlined_call_operand.vmem [shape: f32[4,2], index: 7, kind: input, shape index: {}]
  %s8 = inlined_call_operand.hbm [shape: f32[8,32], index: 8, kind: output, shape index: {0}]
  %s9 = inlined_call_operand.vmem [shape: f32[8,2], index: 9, kind: output, shape index: {1}]
  %10 = xla_tuple %s8, %s9
  %s11 = sld [smem:[#allocation0]]
  $region62: #{tpu_custom_call.1} parent=0
    _
  %s13 = ssub.s32 1, %s11
  %s14 = scalar_select 0, %s13, %s11
  %15 = sst [smem:[#allocation2]] %s5
  %16 = sst [smem:[#allocation3]] %s6
  $region1: #{tpu_custom_call.1} parent=0
    #allocation4 [shape = 'u8[8192]{0}', space=vmem, size = 0x2000, scoped, tag = 'input window, operand 0, single buffered']
    #allocation5 [shape = 's32[1]{0}', space=sflag, size = 0x4, scoped, tag = 'scoped memory for tpu_custom_call.1']
    #allocation6 [shape = 's32[1]{0}', space=sflag, size = 0x4, scoped, tag = 'scoped memory for tpu_custom_call.1']
    #allocation7 [shape = 's32[1]{0}', space=sflag, size = 0x4, scoped, tag = 'scoped memory for tpu_custom_call.1']
    #allocation8 [shape = 'u8[8192]{0}', space=vmem, size = 0x2000, scoped, tag = 'input window, operand 2, single buffered']
    #allocation9 [shape = 's32[1]{0}', space=sflag, size = 0x4, scoped, tag = 'scoped memory for tpu_custom_call.1']
    #allocation10 [shape = 'u8[2048]{0}', space=smem, size = 0x800, scoped, tag = 'input window, operand 7, single buffered']
    #allocation11 [shape = 'u8[4096]{0}', space=vmem, size = 0x1000, scoped, tag = 'output window, operand 0, single buffered']
    %17 = vsyncpa [#allocation5], 0
    %18 = vsyncpa [#allocation9], 0
    %19 = vsyncpa [#allocation7], 0
    %20 = vsyncpa [#allocation6], 0
    // Predicated region
    $region2: #{tpu_custom_call.1} parent=1 // pred_check
      _
    $region3: #{tpu_custom_call.1} parent=1 // pred_check_branch
      %22 = sbr.rel (0) target = $region5
    $region4: #{tpu_custom_call.1} parent=1 // pred_region
      %s24 = ssub.s32 256, 256
      %25 = vsyncadd [#allocation5], %s24
      %s26 = sshll.u32 [#allocation4], 4
      %s27 = int_to_ptr.vmem [resolvable:$true] %s26
      %32 = dma.hbm_to_vmem [thread:$0]  %s0, 256, %s27, [#allocation5], 128, 128, 8
    $region5: #{tpu_custom_call.1} parent=1 // pred_fallthru
      _
    // Predicated region
    $region6: #{tpu_custom_call.1} parent=1 // pred_check
      _
    $region7: #{tpu_custom_call.1} parent=1 // pred_check_branch
      %34 = sbr.rel (0) target = $region9
    $region8: #{tpu_custom_call.1} parent=1 // pred_region
      _
    $region9: #{tpu_custom_call.1} parent=1 // pred_fallthru
      _
    // Predicated region
    $region10: #{tpu_custom_call.1} parent=1 // pred_check
      _
    $region11: #{tpu_custom_call.1} parent=1 // pred_check_branch
      %36 = sbr.rel (0) target = $region13
    $region12: #{tpu_custom_call.1} parent=1 // pred_region
      %s38 = ssub.s32 256, 256
      %39 = vsyncadd [#allocation9], %s38
      %s40 = sshll.u32 [#allocation8], 4
      %s41 = int_to_ptr.vmem [resolvable:$true] %s40
      %46 = dma.hbm_to_vmem [thread:$0]  %s2, 256, %s41, [#allocation9], 128, 128, 8
    $region13: #{tpu_custom_call.1} parent=1 // pred_fallthru
      _
    // Predicated region
    $region14: #{tpu_custom_call.1} parent=1 // pred_check
      _
    $region15: #{tpu_custom_call.1} parent=1 // pred_check_branch
      %48 = sbr.rel (0) target = $region17
    $region16: #{tpu_custom_call.1} parent=1 // pred_region
      _
    $region17: #{tpu_custom_call.1} parent=1 // pred_fallthru
      _
    // Predicated region
    $region18: #{tpu_custom_call.1} parent=1 // pred_check
      _
    $region19: #{tpu_custom_call.1} parent=1 // pred_check_branch
      %50 = sbr.rel (0) target = $region21
    $region20: #{tpu_custom_call.1} parent=1 // pred_region
      _
    $region21: #{tpu_custom_call.1} parent=1 // pred_fallthru
      _
    // Predicated region
    $region22: #{tpu_custom_call.1} parent=1 // pred_check
      _
    $region23: #{tpu_custom_call.1} parent=1 // pred_check_branch
      %52 = sbr.rel (0) target = $region25
    $region24: #{tpu_custom_call.1} parent=1 // pred_region
      _
    $region25: #{tpu_custom_call.1} parent=1 // pred_fallthru
      _
    // Predicated region
    $region26: #{tpu_custom_call.1} parent=1 // pred_check
      _
    $region27: #{tpu_custom_call.1} parent=1 // pred_check_branch
      %54 = sbr.rel (0) target = $region29
    $region28: #{tpu_custom_call.1} parent=1 // pred_region
      _
    $region29: #{tpu_custom_call.1} parent=1 // pred_fallthru
      _
    // Predicated region
    $region30: #{tpu_custom_call.1} parent=1 // pred_check
      _
    $region31: #{tpu_custom_call.1} parent=1 // pred_check_branch
      %56 = sbr.rel (0) target = $region33
    $region32: #{tpu_custom_call.1} parent=1 // pred_region
      %s58 = ssub.s32 64, 64
      %59 = vsyncadd [#allocation7], %s58
      %s61 = sshll.u32 %s7, 4
      %s62 = int_to_ptr.vmem [resolvable:$true] %s61
      %64 = dma.vmem_to_smem %s62, 64, [#allocation10], [#allocation7]
    $region33: #{tpu_custom_call.1} parent=1 // pred_fallthru
      _
    // Predicated region
    $region34: #{tpu_custom_call.1} parent=1 // pred_check
      _
    $region35: #{tpu_custom_call.1} parent=1 // pred_check_branch
      %66 = sbr.rel (0) target = $region37
    $region36: #{tpu_custom_call.1} parent=1 // pred_region
      %67 = dma.done [#allocation5], 256
    $region37: #{tpu_custom_call.1} parent=1 // pred_fallthru
      _
    // Predicated region
    $region38: #{tpu_custom_call.1} parent=1 // pred_check
      _
    $region39: #{tpu_custom_call.1} parent=1 // pred_check_branch
      %69 = sbr.rel (0) target = $region41
    $region40: #{tpu_custom_call.1} parent=1 // pred_region
      %70 = dma.done [#allocation9], 256
    $region41: #{tpu_custom_call.1} parent=1 // pred_fallthru
      _
    // Predicated region
    $region42: #{tpu_custom_call.1} parent=1 // pred_check
      _
    $region43: #{tpu_custom_call.1} parent=1 // pred_check_branch
      %72 = sbr.rel (0) target = $region45
    $region44: #{tpu_custom_call.1} parent=1 // pred_region
      %73 = dma.done [#allocation7], 64
    $region45: #{tpu_custom_call.1} parent=1 // pred_fallthru
      _
    %74 = sfence
    %v75 = vld [vmem:[#allocation4] sm:$0xff]
    %v76 = vld [vmem:[#allocation4 + $0x8] sm:$0xff]
    %v77 = vld [vmem:[#allocation8] sm:$0xff]
    %v78 = vld [vmem:[#allocation8 + $0x8] sm:$0xff]
    %v79 = vld [vmem:[%s3] sm:$0x1]
    %v81 = vlaneseq
    %v82 = vshrl.u32 %v81, 7
    %v83 = vsub.s32 0, %v82
    %v84 = vrot.slane %v79, %v83
    %vm86 = vcmask 130048
    %v88 = vsel %vm86, %v75, 0
    %v91 = vsel %vm86, %v76, 0
    %93 = vmatprep.subr.mxu0 0.0
    %94 = vmatpush1.msra.mxu0 %v77
    %95 = vmatprep.subr.mxu0 0.0
    %96 = vmatpush1.msra.mxu0 %v78
    %97 = vmatprep.subr.mxu0 0.0
    %98 = vmatpush1.msra.mxu0 0.0
    %99 = vmatprep.subr.mxu0 0.0
    %100 = vmatpush1.msra.mxu0 0.0
    %101 = vmatprep.subr.mxu0 0.0
    %102 = vmatpush1.msra.mxu0 0.0
    %103 = vmatprep.subr.mxu0 0.0
    %104 = vmatpush1.msra.mxu0 0.0
    %105 = vmatprep.subr.mxu0 0.0
    %106 = vmatpush1.msra.mxu0 0.0
    %107 = vmatprep.subr.mxu0 0.0
    %108 = vmatpush1.msra.mxu0 0.0
    %109 = vmatprep.subr.mxu0 0.0
    %110 = vmatpush1.msra.mxu0 0.0
    %111 = vmatprep.subr.mxu0 0.0
    %112 = vmatpush1.msra.mxu0 0.0
    %113 = vmatprep.subr.mxu0 0.0
    %114 = vmatpush1.msra.mxu0 0.0
    %115 = vmatprep.subr.mxu0 0.0
    %116 = vmatpush1.msra.mxu0 0.0
    %117 = vmatprep.subr.mxu0 0.0
    %118 = vmatpush1.msra.mxu0 0.0
    %119 = vmatprep.subr.mxu0 0.0
    %120 = vmatpush1.msra.mxu0 0.0
    %121 = vmatprep.subr.mxu0 0.0
    %122 = vmatpush1.msra.mxu0 0.0
    %123 = vmatprep.subr.mxu0 0.0
    %124 = vmatpush1.msra.mxu0 0.0
    %125 = vmatprep.subr.mxu0 0.0
    %126 = vmatpush1.msra.mxu0 0.0
    %127 = vmatprep.subr.mxu0 0.0
    %128 = vmatpush1.msra.mxu0 0.0
    %129 = vmatprep.subr.mxu0 0.0
    %130 = vmatpush1.msra.mxu0 0.0
    %131 = vmatprep.subr.mxu0 0.0
    %132 = vmatpush1.msra.mxu0 0.0
    %133 = vmatprep.subr.mxu0 0.0
    %134 = vmatpush1.msra.mxu0 0.0
    %135 = vmatprep.subr.mxu0 0.0
    %136 = vmatpush1.msra.mxu0 0.0
    %137 = vmatprep.subr.mxu0 0.0
    %138 = vmatpush1.msra.mxu0 0.0
    %139 = vmatprep.subr.mxu0 0.0
    %140 = vmatpush1.msra.mxu0 0.0
    %141 = vmatprep.subr.mxu0 0.0
    %142 = vmatpush1.msra.mxu0 0.0
    %143 = vmatprep.subr.mxu0 0.0
    %144 = vmatpush1.msra.mxu0 0.0
    %145 = vmatprep.subr.mxu0 0.0
    %146 = vmatpush1.msra.mxu0 0.0
    %147 = vmatprep.subr.mxu0 0.0
    %148 = vmatpush1.msra.mxu0 0.0
    %149 = vmatprep.subr.mxu0 0.0
    %150 = vmatpush1.msra.mxu0 0.0
    %151 = vmatprep.subr.mxu0 0.0
    %152 = vmatpush1.msra.mxu0 0.0
    %153 = vmatprep.subr.mxu0 0.0
    %154 = vmatpush1.msra.mxu0 0.0
    %155 = vmatprep.subr.mxu0 0.0
    %156 = vmatpush1.msra.mxu0 0.0
    %157 = vmatprep.mubr.f32.mxu0 0.0
    %158 = vmatmul.mubr.f32.gmra.mrb[0].mxu0 %v88
    %v159 = vpop.f32.mrb[0].mxu0
    %v160 = vadd.f32 %v84, %v159
    %v161 = vpop.f32.mrb[0].mxu0
    %162 = vmatprep.mubr.f32.mxu0 0.0
    %163 = vmatmul.mubr.f32.gmra.mrb[0].mxu0 %v91
    %v164 = vpop.f32.mrb[0].mxu0
    %v165 = vadd.f32 %v84, %v164
    %v166 = vpop.f32.mrb[0].mxu0
    %167 = vdwg.mxu0
    %s168 = sld [smem:[#allocation3]]
    %vm169 = vcmp.ge.f32.partialorder %v160, 0.0
    %vm170 = vcmp.ge.f32.partialorder %v165, 0.0
    %v171 = vstv %s168
    %v172 = vmul.f32 %v171, %v160
    %v173 = vmul.f32 %v171, %v165
    %v174 = vsel %vm169, %v160, %v172
    %v175 = vsel %vm170, %v165, %v173
    %v176 = vld [vmem:[%s4] sm:$0x1]
    %v178 = vlaneseq
    %v179 = vshrl.u32 %v178, 7
    %v180 = vsub.s32 0, %v179
    %v181 = vrot.slane %v176, %v180
    %v183 = vmul.f32 %v174, %v181
    %v184 = vmul.f32 %v175, %v181
    %vm185 = vcmask 261120
    %v186 = vsel %vm185, %v183, 0.0
    %187 = vadd.xlane.f32.xlu0 %v186
    %v188 = vpop.xlane.xlu0 %187
    %v189 = vsel %vm185, %v184, 0.0
    %190 = vadd.xlane.f32.xlu0 %v189
    %v191 = vpop.xlane.xlu0 %190
    %s192 = sld [smem:[#allocation2]]
    %v193 = vstv %s192
    %v194 = vadd.f32 %v188, %v193
    %v195 = vadd.f32 %v191, %v193
    %s196 = sld [smem:[#allocation10]]
    %s197 = sld [smem:[#allocation10 + $0x1]]
    %s198 = sld [smem:[#allocation10 + $0x80]]
    %s199 = sld [smem:[#allocation10 + $0x81]]
    %s200 = sld [smem:[#allocation10 + $0x100]]
    %s201 = sld [smem:[#allocation10 + $0x101]]
    %s202 = sld [smem:[#allocation10 + $0x180]]
    %s203 = sld [smem:[#allocation10 + $0x181]]
    %v204 = vstv %s200
    %v205 = vsub.f32 %v194, %v204
    %s206 = sadd.f32 %s202, 1e-05
    %v207 = vstv %s206
    %v208 = vrsqrt.pop %v207
    %s209 = vtos %v208
    %v210 = vstv %s209
    %v211 = vmul.f32 %v205, %v210
    %v212 = vstv %s196
    %v213 = vmul.f32 %v211, %v212
    %v214 = vstv %s198
    %v215 = vadd.f32 %v213, %v214
    %v216 = vstv %s201
    %v217 = vsub.f32 %v195, %v216
    %s218 = sadd.f32 %s203, 1e-05
    %v219 = vstv %s218
    %v220 = vrsqrt.pop %v219
    %s221 = vtos %v220
    %v222 = vstv %s221
    %v223 = vmul.f32 %v217, %v222
    %v224 = vstv %s197
    %v225 = vmul.f32 %v223, %v224
    %v226 = vstv %s199
    %v227 = vadd.f32 %v225, %v226
    %v228 = vtanh.pop %v215
    %v229 = vtanh.pop %v227
    %v230 = vsub.f32 %v228, %v229
    %v231 = vxor.u32 %v230, 2147483648
    %v232 = vmul.f32 %v231, 1.442695
    %v233 = vpow.pop %v232
    %v234 = vadd.f32 %v233, 1.0
    %v235 = vrcp.pop %v234
    %v236 = vmul.f32 1.0, %v235
    %v237 = vsub.f32 1.0, %v236
    %v238 = vld [vmem:[%s1] sm:$0xff]
    %v239 = vld [vmem:[%s1 + $0x8] sm:$0xff]
    %v240 = vmul.f32 %v236, %v238
    %v241 = vmul.f32 %v237, %v239
    %v242 = vadd.f32 %v240, %v241
    %243 = vst.msk [vmem:[#allocation11] sm:$0xff] %vm185, %v242
    %vm244 = vcmask 7168
    %v245 = vsel %vm244, %v236, %v237
    %vm246 = vcmask 15360
    %247 = vst.msk [vmem:[%s9] sm:$0xff] %vm246, %v245
    // Predicated region
    $region46: #{tpu_custom_call.1} parent=1 // pred_check
      _
    $region47: #{tpu_custom_call.1} parent=1 // pred_check_branch
      %249 = sbr.rel (0) target = $region49
    $region48: #{tpu_custom_call.1} parent=1 // pred_region
      %s251 = ssub.s32 128, 128
      %252 = vsyncadd [#allocation6], %s251
      %s254 = sshll.u32 [#allocation11], 4
      %s255 = int_to_ptr.vmem [resolvable:$true] %s254
      %257 = dma.vmem_to_hbm [thread:$0]  %s255, 128, %s8, [#allocation6]
    $region49: #{tpu_custom_call.1} parent=1 // pred_fallthru
      _
    // Predicated region
    $region50: #{tpu_custom_call.1} parent=1 // pred_check
      _
    $region51: #{tpu_custom_call.1} parent=1 // pred_check_branch
      %259 = sbr.rel (0) target = $region53
    $region52: #{tpu_custom_call.1} parent=1 // pred_region
      _
    $region53: #{tpu_custom_call.1} parent=1 // pred_fallthru
      _
    // Predicated region
    $region54: #{tpu_custom_call.1} parent=1 // pred_check
      _
    $region55: #{tpu_custom_call.1} parent=1 // pred_check_branch
      %261 = sbr.rel (0) target = $region57
    $region56: #{tpu_custom_call.1} parent=1 // pred_region
      %262 = dma.done [#allocation6], 128
    $region57: #{tpu_custom_call.1} parent=1 // pred_fallthru
      _
    // Predicated region
    $region58: #{tpu_custom_call.1} parent=1 // pred_check
      _
    $region59: #{tpu_custom_call.1} parent=1 // pred_check_branch
      %264 = sbr.rel (0) target = $region61
    $region60: #{tpu_custom_call.1} parent=1 // pred_region
      _
    $region61: #{tpu_custom_call.1} parent=1 // pred_fallthru
      _
    %265 = vsyncpa [#allocation5], 1
    %266 = vsyncpa [#allocation9], 1
    %267 = vsyncpa [#allocation6], 1
    %268 = vsyncpa [#allocation7], 1

</llo_original>
